<compile_context>
chip_gen: v6e
topology: v6e:2x2x1
jax: 0.10.0
libtpu: 0.0.40
codegen_flags: <defaults>
</compile_context>

<pallas_src>
import functools

import jax
import jax.numpy as jnp
from jax.experimental import pallas as pl
from jax.experimental.pallas import tpu as pltpu

# ---- model hyperparameters (small, consistent with the module) -------------
FILTER_SIZES = (3, 4, 5)
BATCH = 2
SEQ = 8            # sentence length
EMBED = 32         # word2vec vector_size (shrunk from 100)
NUM_FILTERS = 32   # num_filters (shrunk from 100)
OUTPUT_SIZE = 2

MAX_FS = max(FILTER_SIZES)                 # 5
SEQ_PAD = SEQ + MAX_FS - 1                 # 12  (end-padded seq length)
NF3 = len(FILTER_SIZES) * NUM_FILTERS      # 96  (real conv output width)
N_CONV = 128                               # conv output padded to lane-dense 128
N_OUT = 128                                # fc output padded to lane-dense 128
# Batch tile: multiple of 8 (full sublane tile / lane-dense output block).
# At realistic batch sizes raise it so TB*SEQ >= 256 (e.g. TB=32..128) to feed
# the MXU a decent M; at BATCH=2 one grid step with TB=8 is already the floor.
TB = 8
# NOTE for the real config (E=100, F=100): pad E->128 per offset slab,
# N_CONV: 300 -> 384, keep N_OUT=128 so every matmul/store stays lane-dense.

assert NF3 <= N_CONV and OUTPUT_SIZE <= N_OUT and EMBED >= 2 and TB % 8 == 0


def cnn_kernel(x_ref, wpack_ref, fcw_ref, o_ref):
    """Full forward pass for one batch tile.

    x_ref     : (TB, SEQ_PAD, E)      bf16, seq already end-padded by MAX_FS-1
    wpack_ref : (MAX_FS+1, E, 128)    bf16; slabs 0..4 = packed conv weights
                                      (zero slabs for offsets >= fs), slab 5:
                                      row 0 = conv bias, row 1 = fc bias
    fcw_ref   : (128, 128)            bf16 fc weight, pre-transposed + padded
    o_ref     : (TB, 128)             f32 lane-dense tile; real data [:, :OUT]
    """
    tb = x_ref.shape[0]
    m = tb * SEQ

    # Biases ride in slab MAX_FS of the packed weight (one less operand DMA).
    bias_slab = wpack_ref[MAX_FS]                              # (E, 128) bf16
    conv_b = bias_slab[0:1, :].astype(jnp.float32)             # (1, 128)
    fc_b = bias_slab[1:2, :].astype(jnp.float32)               # (1, 128)

    # Fused conv (all three filter sizes) as 5 shifted MXU dots, f32 accumulate:
    #   acc[b*S + s, :] += x_pad[b, s+i, :] @ wpack[i]
    acc = jnp.dot(x_ref[:, 0:SEQ, :].reshape(m, EMBED), wpack_ref[0],
                  preferred_element_type=jnp.float32)          # (m, 128) f32
    for i in range(1, MAX_FS):
        xi = x_ref[:, i:i + SEQ, :].reshape(m, EMBED)          # (m, E) bf16
        acc = acc + jnp.dot(xi, wpack_ref[i],
                            preferred_element_type=jnp.float32)

    # Bias + ReLU on the VPU (f32).  Padded lanes: bias 0 -> ReLU(0) = 0.
    conv = jnp.maximum(acc + conv_b, 0.0)                      # (m, 128) f32

    # max_pool1d over the seq axis; filter-size blocks are already adjacent
    # along the lane axis, so there is no concat (and no row-pad: TB % 8 == 0).
    pooled = jnp.max(conv.reshape(tb, SEQ, N_CONV), axis=1)    # (tb, 128) f32

    # FC: bf16 MXU operands, f32 accumulate, lane-dense full-tile store.
    out = jnp.dot(pooled.astype(jnp.bfloat16), fcw_ref[...],
                  preferred_element_type=jnp.float32) + fc_b   # (tb, 128) f32
    o_ref[...] = out.astype(o_ref.dtype)


def pack_params(params):
    """One-time layout plumbing: MXU-ready, zero-padded, bf16 packed weights.

    Returns:
      wpack_ext : (MAX_FS+1, EMBED, N_CONV) bf16 — per-offset conv weight slabs
                  (wpack[i, e, c0+f] = w_fs[f, i, e]; zero for i >= fs) plus a
                  trailing bias slab (row 0 conv bias, row 1 fc bias).
      fcw       : (N_CONV, N_OUT) bf16 — fc weight transposed + zero padded.
    """
    wpack = jnp.zeros((MAX_FS + 1, EMBED, N_CONV), jnp.float32)
    for k, fs in enumerate(FILTER_SIZES):
        w = params[f'w{fs}']                                   # (F, fs, E)
        c0 = k * NUM_FILTERS
        for i in range(fs):
            wpack = wpack.at[i, :, c0:c0 + NUM_FILTERS].set(w[:, i, :].T)
        wpack = wpack.at[MAX_FS, 0, c0:c0 + NUM_FILTERS].set(params[f'b{fs}'][0])
    wpack = wpack.at[MAX_FS, 1, :OUTPUT_SIZE].set(params['fc_b'][0])

    fcw = jnp.zeros((N_CONV, N_OUT), jnp.float32)
    fcw = fcw.at[:NF3, :OUTPUT_SIZE].set(params['fc_w'].T)     # (3F, OUT) block
    # TODO(synk): if this model is ever quantized, v7x's MXU has no int path —
    # pack fp8 weights (bf16/f32 accumulate) here instead of int8.
    return wpack.astype(jnp.bfloat16), fcw.astype(jnp.bfloat16)


@functools.partial(jax.jit, static_argnames=("tb",))
def cnn_forward(x, wpack_ext, fcw, *, tb=TB):
    """x: (B, S, E) float32; packed params from pack_params()."""
    assert tb % 8 == 0
    b = x.shape[0]
    bp = (b + tb - 1) // tb * tb
    # One-time wrapper-side padding: batch up to the tile, seq end-pad by
    # MAX_FS-1 (module semantics), cast to bf16 (halves DMA bytes / VMEM).
    x_pad = jnp.pad(x, ((0, bp - b), (0, MAX_FS - 1), (0, 0))).astype(jnp.bfloat16)

    out_pad = pl.pallas_call(
        cnn_kernel,
        out_shape=jax.ShapeDtypeStruct((bp, N_OUT), jnp.float32),
        grid_spec=pltpu.PrefetchScalarGridSpec(
            num_scalar_prefetch=0,
            grid=(bp // tb,),
            in_specs=[
                # batch-tiled input; double-buffered by the pipeline
                pl.BlockSpec((tb, SEQ_PAD, EMBED), lambda i: (i, 0, 0)),
                # weights: constant index_map -> fetched once, VMEM-resident
                pl.BlockSpec((MAX_FS + 1, EMBED, N_CONV), lambda i: (0, 0, 0)),
                pl.BlockSpec((N_CONV, N_OUT), lambda i: (0, 0)),
            ],
            out_specs=pl.BlockSpec((tb, N_OUT), lambda i: (i, 0)),
        ),
        # Batch axis is embarrassingly parallel -> shard grid steps across
        # TensorCores on v7x.  Footprint per step is a few hundred KiB, far
        # below the 32 MiB scoped VMEM default on every generation.
        compiler_params=pltpu.CompilerParams(
            dimension_semantics=("parallel",),
        ),
    )(x_pad, wpack_ext, fcw)
    return out_pad[:b, :OUTPUT_SIZE]


def make_params(key):
    """Deterministic synthetic parameters matching the nn.Module shapes."""
    keys = jax.random.split(key, 8)
    params = {}
    for i, fs in enumerate(FILTER_SIZES):
        # nn.Conv2d(1, F, (fs, E)).weight: (F, 1, fs, E) -> squeeze -> (F, fs, E)
        params[f'w{fs}'] = 0.05 * jax.random.normal(
            keys[2 * i], (NUM_FILTERS, fs, EMBED), jnp.float32)
        params[f'b{fs}'] = 0.05 * jax.random.normal(
            keys[2 * i + 1], (1, NUM_FILTERS), jnp.float32)
    # nn.Linear(3*F, OUT): weight (OUT, 3*F), bias (OUT,) -> (1, OUT)
    params['fc_w'] = 0.05 * jax.random.normal(
        keys[6], (OUTPUT_SIZE, NF3), jnp.float32)
    params['fc_b'] = 0.05 * jax.random.normal(
        keys[7], (1, OUTPUT_SIZE), jnp.float32)
    return params


def ref_forward(x, params, mxu_dtype=jnp.float32):
    """Pure-JAX reference mirroring the PyTorch forward (right-pad by fs-1).

    mxu_dtype=jnp.bfloat16 mirrors the kernel's precision policy (bf16 matmul
    operands, f32 accumulation/elementwise) for a tight numerical check.
    """
    cast = lambda a: a.astype(mxu_dtype)
    rnd = lambda a: a.astype(mxu_dtype).astype(jnp.float32)
    pooled = []
    for fs in FILTER_SIZES:
        w, b = params[f'w{fs}'], params[f'b{fs}']
        xp = jnp.pad(x, ((0, 0), (0, fs - 1), (0, 0)))
        out = sum(jnp.einsum('bse,fe->bsf', cast(xp[:, i:i + SEQ, :]),
                             cast(w[:, i, :]),
                             preferred_element_type=jnp.float32)
                  for i in range(fs))
        out = jnp.maximum(out + rnd(b)[:, None, :], 0.0)
        pooled.append(out.max(axis=1))
    cat = jnp.concatenate(pooled, axis=1)
    fc = jnp.dot(cast(cat), cast(params['fc_w'].T),
                 preferred_element_type=jnp.float32)
    return fc + rnd(params['fc_b'])


if __name__ == "__main__":
    key = jax.random.PRNGKey(0)
    k_x, k_p = jax.random.split(key)
    x = jax.random.normal(k_x, (BATCH, SEQ, EMBED), jnp.float32)
    params = make_params(k_p)

    wpack_ext, fcw = pack_params(params)          # one-time weight packing

    out = jax.block_until_ready(cnn_forward(x, wpack_ext, fcw))
    assert out.shape == (BATCH, OUTPUT_SIZE)

    # Tight check against a reference using the same bf16-operand policy.
    ref_bf16 = ref_forward(x, params, mxu_dtype=jnp.bfloat16)
    assert jnp.allclose(out, ref_bf16, rtol=5e-3, atol=5e-3), (out, ref_bf16)
    # Looser check against the exact f32 module semantics (bf16 rounding only).
    ref_f32 = ref_forward(x, params)
    assert jnp.allclose(out, ref_f32, rtol=6e-2, atol=6e-2), (out, ref_f32)

    print("KERNEL_OK")
</pallas_src>

<mosaic_0001>
module attributes {stable_mosaic.version = 11 : i64} {
  func.func @cnn_kernel(%arg0: i32, %arg1: memref<8x12x32xbf16, #tpu.memory_space<vmem>>, %arg2: memref<6x32x128xbf16, #tpu.memory_space<vmem>>, %arg3: memref<128x128xbf16, #tpu.memory_space<vmem>>, %arg4: memref<8x128xf32, #tpu.memory_space<vmem>>) attributes {dimension_semantics = [#tpu.dimension_semantics<parallel>], iteration_bounds = array<i64: 1>, scalar_prefetch = 0 : i64, scratch_operands = 0 : i64, tpu.core_type = #tpu.core_type<tc>, window_params = [{transform_indices = @transform_0, window_bounds = array<i64: 8, 12, 32>}, {pipeline_mode = #tpu.pipeline_mode<synchronous>, transform_indices = @transform_1, window_bounds = array<i64: 6, 32, 128>}, {pipeline_mode = #tpu.pipeline_mode<synchronous>, transform_indices = @transform_2, window_bounds = array<i64: 128, 128>}, {transform_indices = @transform_3, window_bounds = array<i64: 8, 128>}]} {
    %c5 = arith.constant 5 : index
    %c0 = arith.constant 0 : index
    %c0_0 = arith.constant 0 : index
    %0 = vector.load %arg2[%c5, %c0, %c0_0] : memref<6x32x128xbf16, #tpu.memory_space<vmem>>, vector<1x32x128xbf16>
    %1 = vector.shape_cast %0 : vector<1x32x128xbf16> to vector<32x128xbf16>
    %2 = vector.extract_strided_slice %1 {offsets = [0, 0], sizes = [1, 128], strides = [1, 1]} : vector<32x128xbf16> to vector<1x128xbf16>
    %3 = arith.extf %2 : vector<1x128xbf16> to vector<1x128xf32>
    %4 = vector.extract_strided_slice %1 {offsets = [1, 0], sizes = [1, 128], strides = [1, 1]} : vector<32x128xbf16> to vector<1x128xbf16>
    %5 = arith.extf %4 : vector<1x128xbf16> to vector<1x128xf32>
    %c0_1 = arith.constant 0 : index
    %c0_2 = arith.constant 0 : index
    %c0_3 = arith.constant 0 : index
    %6 = vector.load %arg1[%c0_1, %c0_2, %c0_3] : memref<8x12x32xbf16, #tpu.memory_space<vmem>>, vector<8x8x32xbf16>
    %7 = vector.shape_cast %6 : vector<8x8x32xbf16> to vector<64x32xbf16>
    %c0_4 = arith.constant 0 : index
    %c0_5 = arith.constant 0 : index
    %c0_6 = arith.constant 0 : index
    %8 = vector.load %arg2[%c0_4, %c0_5, %c0_6] : memref<6x32x128xbf16, #tpu.memory_space<vmem>>, vector<1x32x128xbf16>
    %9 = vector.shape_cast %8 : vector<1x32x128xbf16> to vector<32x128xbf16>
    %cst = arith.constant dense<0.000000e+00> : vector<64x128xf32>
    %10 = tpu.matmul %7, %9, %cst {dimension_numbers = #tpu.dot_dimension_numbers<[1], [0], [0], [1], [0, 0, 1, 1], [], []>} : vector<64x32xbf16>, vector<32x128xbf16>, vector<64x128xf32> -> vector<64x128xf32>
    %c0_7 = arith.constant 0 : index
    %c1 = arith.constant 1 : index
    %c0_8 = arith.constant 0 : index
    %11 = vector.load %arg1[%c0_7, %c1, %c0_8] : memref<8x12x32xbf16, #tpu.memory_space<vmem>>, vector<8x8x32xbf16>
    %12 = vector.shape_cast %11 : vector<8x8x32xbf16> to vector<64x32xbf16>
    %c1_9 = arith.constant 1 : index
    %c0_10 = arith.constant 0 : index
    %c0_11 = arith.constant 0 : index
    %13 = vector.load %arg2[%c1_9, %c0_10, %c0_11] : memref<6x32x128xbf16, #tpu.memory_space<vmem>>, vector<1x32x128xbf16>
    %14 = vector.shape_cast %13 : vector<1x32x128xbf16> to vector<32x128xbf16>
    %cst_12 = arith.constant dense<0.000000e+00> : vector<64x128xf32>
    %15 = tpu.matmul %12, %14, %cst_12 {dimension_numbers = #tpu.dot_dimension_numbers<[1], [0], [0], [1], [0, 0, 1, 1], [], []>} : vector<64x32xbf16>, vector<32x128xbf16>, vector<64x128xf32> -> vector<64x128xf32>
    %16 = arith.addf %10, %15 : vector<64x128xf32>
    %c0_13 = arith.constant 0 : index
    %c2 = arith.constant 2 : index
    %c0_14 = arith.constant 0 : index
    %17 = vector.load %arg1[%c0_13, %c2, %c0_14] : memref<8x12x32xbf16, #tpu.memory_space<vmem>>, vector<8x8x32xbf16>
    %18 = vector.shape_cast %17 : vector<8x8x32xbf16> to vector<64x32xbf16>
    %c2_15 = arith.constant 2 : index
    %c0_16 = arith.constant 0 : index
    %c0_17 = arith.constant 0 : index
    %19 = vector.load %arg2[%c2_15, %c0_16, %c0_17] : memref<6x32x128xbf16, #tpu.memory_space<vmem>>, vector<1x32x128xbf16>
    %20 = vector.shape_cast %19 : vector<1x32x128xbf16> to vector<32x128xbf16>
    %cst_18 = arith.constant dense<0.000000e+00> : vector<64x128xf32>
    %21 = tpu.matmul %18, %20, %cst_18 {dimension_numbers = #tpu.dot_dimension_numbers<[1], [0], [0], [1], [0, 0, 1, 1], [], []>} : vector<64x32xbf16>, vector<32x128xbf16>, vector<64x128xf32> -> vector<64x128xf32>
    %22 = arith.addf %16, %21 : vector<64x128xf32>
    %c0_19 = arith.constant 0 : index
    %c3 = arith.constant 3 : index
    %c0_20 = arith.constant 0 : index
    %23 = vector.load %arg1[%c0_19, %c3, %c0_20] : memref<8x12x32xbf16, #tpu.memory_space<vmem>>, vector<8x8x32xbf16>
    %24 = vector.shape_cast %23 : vector<8x8x32xbf16> to vector<64x32xbf16>
    %c3_21 = arith.constant 3 : index
    %c0_22 = arith.constant 0 : index
    %c0_23 = arith.constant 0 : index
    %25 = vector.load %arg2[%c3_21, %c0_22, %c0_23] : memref<6x32x128xbf16, #tpu.memory_space<vmem>>, vector<1x32x128xbf16>
    %26 = vector.shape_cast %25 : vector<1x32x128xbf16> to vector<32x128xbf16>
    %cst_24 = arith.constant dense<0.000000e+00> : vector<64x128xf32>
    %27 = tpu.matmul %24, %26, %cst_24 {dimension_numbers = #tpu.dot_dimension_numbers<[1], [0], [0], [1], [0, 0, 1, 1], [], []>} : vector<64x32xbf16>, vector<32x128xbf16>, vector<64x128xf32> -> vector<64x128xf32>
    %28 = arith.addf %22, %27 : vector<64x128xf32>
    %c0_25 = arith.constant 0 : index
    %c4 = arith.constant 4 : index
    %c0_26 = arith.constant 0 : index
    %29 = vector.load %arg1[%c0_25, %c4, %c0_26] : memref<8x12x32xbf16, #tpu.memory_space<vmem>>, vector<8x8x32xbf16>
    %30 = vector.shape_cast %29 : vector<8x8x32xbf16> to vector<64x32xbf16>
    %c4_27 = arith.constant 4 : index
    %c0_28 = arith.constant 0 : index
    %c0_29 = arith.constant 0 : index
    %31 = vector.load %arg2[%c4_27, %c0_28, %c0_29] : memref<6x32x128xbf16, #tpu.memory_space<vmem>>, vector<1x32x128xbf16>
    %32 = vector.shape_cast %31 : vector<1x32x128xbf16> to vector<32x128xbf16>
    %cst_30 = arith.constant dense<0.000000e+00> : vector<64x128xf32>
    %33 = tpu.matmul %30, %32, %cst_30 {dimension_numbers = #tpu.dot_dimension_numbers<[1], [0], [0], [1], [0, 0, 1, 1], [], []>} : vector<64x32xbf16>, vector<32x128xbf16>, vector<64x128xf32> -> vector<64x128xf32>
    %34 = arith.addf %28, %33 : vector<64x128xf32>
    %35 = vector.broadcast %3 : vector<1x128xf32> to vector<64x128xf32>
    %36 = arith.addf %34, %35 : vector<64x128xf32>
    %cst_31 = arith.constant 0.000000e+00 : f32
    %37 = vector.broadcast %cst_31 : f32 to vector<64x128xf32>
    %38 = arith.maximumf %36, %37 : vector<64x128xf32>
    %39 = vector.shape_cast %38 : vector<64x128xf32> to vector<8x8x128xf32>
    %cst_32 = arith.constant dense<0xFF800000> : vector<8x128xf32>
    %40 = vector.multi_reduction <maximumf>, %39, %cst_32 [1] : vector<8x8x128xf32> to vector<8x128xf32>
    %41 = arith.truncf %40 : vector<8x128xf32> to vector<8x128xbf16>
    %c0_33 = arith.constant 0 : index
    %c0_34 = arith.constant 0 : index
    %42 = vector.load %arg3[%c0_33, %c0_34] : memref<128x128xbf16, #tpu.memory_space<vmem>>, vector<128x128xbf16>
    %cst_35 = arith.constant dense<0.000000e+00> : vector<8x128xf32>
    %43 = tpu.matmul %41, %42, %cst_35 {dimension_numbers = #tpu.dot_dimension_numbers<[1], [0], [0], [1], [0, 0, 1, 1], [], []>} : vector<8x128xbf16>, vector<128x128xbf16>, vector<8x128xf32> -> vector<8x128xf32>
    %44 = vector.broadcast %5 : vector<1x128xf32> to vector<8x128xf32>
    %45 = arith.addf %43, %44 : vector<8x128xf32>
    %c0_36 = arith.constant 0 : index
    %c0_37 = arith.constant 0 : index
    %46 = vector.load %arg4[%c0_36, %c0_37] : memref<8x128xf32, #tpu.memory_space<vmem>>, vector<8x128xf32>
    tpu.vector_store %arg4[%c0_36, %c0_37], %45 {strides = array<i32>} : memref<8x128xf32, #tpu.memory_space<vmem>>, vector<8x128xf32>,
    return
  }
  func.func @transform_0(%arg0: i32) -> (i32, i32, i32) {
    %c0_i32 = arith.constant 0 : i32
    %c0_i32_0 = arith.constant 0 : i32
    %c0_i32_1 = arith.constant 0 : i32
    return %arg0, %c0_i32, %c0_i32_0 : i32, i32, i32
  }
  func.func @transform_1(%arg0: i32) -> (i32, i32, i32) {
    %c0_i32 = arith.constant 0 : i32
    %c0_i32_0 = arith.constant 0 : i32
    %c0_i32_1 = arith.constant 0 : i32
    %c0_i32_2 = arith.constant 0 : i32
    return %c0_i32, %c0_i32_0, %c0_i32_1 : i32, i32, i32
  }
  func.func @transform_2(%arg0: i32) -> (i32, i32) {
    %c0_i32 = arith.constant 0 : i32
    %c0_i32_0 = arith.constant 0 : i32
    %c0_i32_1 = arith.constant 0 : i32
    return %c0_i32, %c0_i32_0 : i32, i32
  }
  func.func @transform_3(%arg0: i32) -> (i32, i32) {
    %c0_i32 = arith.constant 0 : i32
    %c0_i32_0 = arith.constant 0 : i32
    return %arg0, %c0_i32 : i32, i32
  }
}

</mosaic_0001>

<llo_original>
// kernel: cnn_forward.1
$region0: #{cnn_forward.1}
  #allocation0 [shape = 'u32[]', space=smem, size = 0x4, offset = 0x4, fixed_abs, tag = 'smem constant byte address 0x4 - core index']
  #allocation1 [shape = 'u32[144,128]{1,0:T(1,128)}', space=vmem, size = 0x12000, scoped, tag = 'internal scratch']
  %s0 = inlined_call_operand.vmem [shape: bf16[8,12,32], index: 0, kind: input, shape index: {}]
  %s1 = inlined_call_operand.vmem [shape: bf16[6,32,128], index: 1, kind: input, shape index: {}]
  %s2 = inlined_call_operand.hbm [shape: bf16[128,128], index: 2, kind: input, shape index: {}]
  %s3 = inlined_call_operand.vmem [shape: f32[8,128], index: 3, kind: output, shape index: {}]
  %s4 = sld [smem:[#allocation0]]
  $region26: #{cnn_forward.1} parent=0
    _
  %s6 = ssub.s32 1, %s4
  %s7 = scalar_select 0, %s6, %s4
  $region1: #{cnn_forward.1} parent=0
    #allocation2 [shape = 'u8[32768]{0}', space=vmem, size = 0x8000, scoped, tag = 'input window, operand 2, single buffered']
    #allocation3 [shape = 's32[1]{0}', space=sflag, size = 0x4, scoped, tag = 'scoped memory for cnn_forward.1']
    %8 = vsyncpa [#allocation3], 0
    // Predicated region
    $region2: #{cnn_forward.1} parent=1 // pred_check
      _
    $region3: #{cnn_forward.1} parent=1 // pred_check_branch
      %10 = sbr.rel (0) target = $region5
    $region4: #{cnn_forward.1} parent=1 // pred_region
      _
    $region5: #{cnn_forward.1} parent=1 // pred_fallthru
      _
    // Predicated region
    $region6: #{cnn_forward.1} parent=1 // pred_check
      _
    $region7: #{cnn_forward.1} parent=1 // pred_check_branch
      %12 = sbr.rel (0) target = $region9
    $region8: #{cnn_forward.1} parent=1 // pred_region
      _
    $region9: #{cnn_forward.1} parent=1 // pred_fallthru
      _
    // Predicated region
    $region10: #{cnn_forward.1} parent=1 // pred_check
      _
    $region11: #{cnn_forward.1} parent=1 // pred_check_branch
      %14 = sbr.rel (0) target = $region13
    $region12: #{cnn_forward.1} parent=1 // pred_region
      %s16 = ssub.s32 1024, 1024
      %17 = vsyncadd [#allocation3], %s16
      %s18 = sshll.u32 [#allocation2], 4
      %s19 = int_to_ptr.vmem [resolvable:$true] %s18
      %24 = dma.hbm_to_vmem [thread:$0]  %s2, 1024, %s19, [#allocation3], 64, 64, 4
    $region13: #{cnn_forward.1} parent=1 // pred_fallthru
      _
    // Predicated region
    $region14: #{cnn_forward.1} parent=1 // pred_check
      _
    $region15: #{cnn_forward.1} parent=1 // pred_check_branch
      %26 = sbr.rel (0) target = $region17
    $region16: #{cnn_forward.1} parent=1 // pred_region
      %27 = dma.done [#allocation3], 1024
    $region17: #{cnn_forward.1} parent=1 // pred_fallthru
      _
    %s29 = scalar_lea.vmem %s1, 80
    %v30 = vld [vmem:[%s29] sm:$0xf]
    %v31 = vunpack.c.l.bf16 %v30
    %v32 = vld [vmem:[%s0] sm:$0xf]
    %v33 = vld [vmem:[%s0 + $0x8] sm:$0xf]
    %v34 = vld [vmem:[%s0 + $0x10] sm:$0xf]
    %v35 = vld [vmem:[%s0 + $0x18] sm:$0xf]
    %v36 = vld [vmem:[%s0 + $0x20] sm:$0xf]
    %v37 = vld [vmem:[%s0 + $0x28] sm:$0xf]
    %v38 = vld [vmem:[%s0 + $0x30] sm:$0xf]
    %v39 = vld [vmem:[%s0 + $0x38] sm:$0xf]
    %v40 = vld [vmem:[%s1] sm:$0xf]
    %v41 = vld [vmem:[%s1 + $0x4] sm:$0xf]
    %v42 = vld [vmem:[%s1 + $0x8] sm:$0xf]
    %v43 = vld [vmem:[%s1 + $0xc] sm:$0xf]
    %v44 = vld [vmem:[%s0 + $0x4] sm:$0x1]
    %v45 = vld [vmem:[%s0 + $0xc] sm:$0x1]
    %v46 = vld [vmem:[%s0 + $0x14] sm:$0x1]
    %v47 = vld [vmem:[%s0 + $0x1c] sm:$0x1]
    %v48 = vld [vmem:[%s0 + $0x24] sm:$0x1]
    %v49 = vld [vmem:[%s0 + $0x2c] sm:$0x1]
    %v50 = vld [vmem:[%s0 + $0x34] sm:$0x1]
    %v51 = vld [vmem:[%s0 + $0x3c] sm:$0x1]
    %vm52 = vsmask.f32 3328
    %vm53 = vsmask.f32 7440
    %vm54 = vmor %vm52, %vm53
    %v56 = vshrl.u32 %v32, 16
    %v58 = vrot.slane %v56, 4
    %v59 = vshll.u32 %v32, 16
    %v61 = vrot.slane %v59, 5
    %v62 = vor.u32 %v58, %v61
    %v63 = vrot.slane %v62, 4
    %v65 = vshll.u32 %v44, 16
    %v67 = vrot.slane %v65, 5
    %v68 = vsel %vm54, %v63, %v67
    %v70 = vshrl.u32 %v33, 16
    %v72 = vrot.slane %v70, 4
    %v73 = vshll.u32 %v33, 16
    %v75 = vrot.slane %v73, 5
    %v76 = vor.u32 %v72, %v75
    %v77 = vrot.slane %v76, 4
    %v79 = vshll.u32 %v45, 16
    %v81 = vrot.slane %v79, 5
    %v82 = vsel %vm54, %v77, %v81
    %v84 = vshrl.u32 %v34, 16
    %v86 = vrot.slane %v84, 4
    %v87 = vshll.u32 %v34, 16
    %v89 = vrot.slane %v87, 5
    %v90 = vor.u32 %v86, %v89
    %v91 = vrot.slane %v90, 4
    %v93 = vshll.u32 %v46, 16
    %v95 = vrot.slane %v93, 5
    %v96 = vsel %vm54, %v91, %v95
    %v98 = vshrl.u32 %v35, 16
    %v100 = vrot.slane %v98, 4
    %v101 = vshll.u32 %v35, 16
    %v103 = vrot.slane %v101, 5
    %v104 = vor.u32 %v100, %v103
    %v105 = vrot.slane %v104, 4
    %v107 = vshll.u32 %v47, 16
    %v109 = vrot.slane %v107, 5
    %v110 = vsel %vm54, %v105, %v109
    %v112 = vshrl.u32 %v36, 16
    %v114 = vrot.slane %v112, 4
    %v115 = vshll.u32 %v36, 16
    %v117 = vrot.slane %v115, 5
    %v118 = vor.u32 %v114, %v117
    %v119 = vrot.slane %v118, 4
    %v121 = vshll.u32 %v48, 16
    %v123 = vrot.slane %v121, 5
    %v124 = vsel %vm54, %v119, %v123
    %v126 = vshrl.u32 %v37, 16
    %v128 = vrot.slane %v126, 4
    %v129 = vshll.u32 %v37, 16
    %v131 = vrot.slane %v129, 5
    %v132 = vor.u32 %v128, %v131
    %v133 = vrot.slane %v132, 4
    %v135 = vshll.u32 %v49, 16
    %v137 = vrot.slane %v135, 5
    %v138 = vsel %vm54, %v133, %v137
    %v140 = vshrl.u32 %v38, 16
    %v142 = vrot.slane %v140, 4
    %v143 = vshll.u32 %v38, 16
    %v145 = vrot.slane %v143, 5
    %v146 = vor.u32 %v142, %v145
    %v147 = vrot.slane %v146, 4
    %v149 = vshll.u32 %v50, 16
    %v151 = vrot.slane %v149, 5
    %v152 = vsel %vm54, %v147, %v151
    %v154 = vshrl.u32 %v39, 16
    %v156 = vrot.slane %v154, 4
    %v157 = vshll.u32 %v39, 16
    %v159 = vrot.slane %v157, 5
    %v160 = vor.u32 %v156, %v159
    %v161 = vrot.slane %v160, 4
    %v163 = vshll.u32 %v51, 16
    %v165 = vrot.slane %v163, 5
    %v166 = vsel %vm54, %v161, %v165
    %s167 = scalar_lea.vmem %s1, 16
    %v168 = vld [vmem:[%s167] sm:$0xf]
    %v169 = vld [vmem:[%s167 + $0x4] sm:$0xf]
    %v170 = vld [vmem:[%s167 + $0x8] sm:$0xf]
    %v171 = vld [vmem:[%s167 + $0xc] sm:$0xf]
    %v172 = vunpack.c.l.b16 %v68
    %v173 = vunpack.c.l.b16 %v82
    %v174 = vunpack.c.l.b16 %v96
    %v175 = vunpack.c.l.b16 %v110
    %v176 = vunpack.c.l.b16 %v124
    %v177 = vunpack.c.l.b16 %v138
    %v178 = vunpack.c.l.b16 %v152
    %v179 = vunpack.c.l.b16 %v166
    %v180 = vpack.c.b16 %v173, %v172
    %v181 = vpack.c.b16 %v175, %v174
    %v182 = vpack.c.b16 %v177, %v176
    %v183 = vpack.c.b16 %v179, %v178
    %v188 = vunpack.c.l.b16 %v168
    %v189 = vunpack.c.l.b16 %v169
    %v190 = vunpack.c.l.b16 %v170
    %v191 = vunpack.c.l.b16 %v171
    %v192 = vpack.c.b16 %v189, %v188
    %v193 = vpack.c.b16 %v191, %v190
    %vm196 = vcmask 261120
    %v198 = vsel %vm196, %v180, 0
    %v201 = vsel %vm196, %v181, 0
    %v204 = vsel %vm196, %v182, 0
    %v207 = vsel %vm196, %v183, 0
    %209 = vmatprep.subr.bf16.mxu0 0
    %210 = vmatpush1.bf16.msra.mxu0 0
    %211 = vmatprep.subr.bf16.mxu0 0
    %212 = vmatpush1.bf16.msra.mxu0 0
    %213 = vmatprep.subr.bf16.mxu0 0
    %214 = vmatpush1.bf16.msra.mxu0 0
    %215 = vmatprep.subr.bf16.mxu0 0
    %216 = vmatpush1.bf16.msra.mxu0 0
    %217 = vmatprep.subr.bf16.mxu0 0
    %218 = vmatpush1.bf16.msra.mxu0 0
    %219 = vmatprep.subr.bf16.mxu0 0
    %220 = vmatpush1.bf16.msra.mxu0 0
    %221 = vmatprep.subr.bf16.mxu0 0
    %222 = vmatpush1.bf16.msra.mxu0 %v193
    %223 = vmatprep.subr.bf16.mxu0 0
    %224 = vmatpush1.bf16.msra.mxu0 %v192
    %225 = vmatprep.subr.bf16.mxu0 0
    %226 = vmatpush2.bf16.msra.mxu0 0
    %227 = vmatprep.subr.bf16.mxu0 0
    %228 = vmatpush2.bf16.msra.mxu0 0
    %229 = vmatprep.subr.bf16.mxu0 0
    %230 = vmatpush2.bf16.msra.mxu0 0
    %231 = vmatprep.subr.bf16.mxu0 0
    %232 = vmatpush2.bf16.msra.mxu0 0
    %233 = vmatprep.subr.bf16.mxu0 0
    %234 = vmatpush2.bf16.msra.mxu0 0
    %235 = vmatprep.subr.bf16.mxu0 0
    %236 = vmatpush2.bf16.msra.mxu0 0
    %237 = vmatprep.subr.bf16.mxu0 0
    %238 = vmatpush2.bf16.msra.mxu0 0
    %239 = vmatprep.subr.bf16.mxu0 0
    %240 = vmatpush2.bf16.msra.mxu0 0
    %241 = vmatprep.mubr.bf16.mxu0 0
    %242 = vmatmul.mubr.bf16.gmra.mxu0 %v198
    %v243 = vpop.f32.mrf.mxu0
    %v244 = vadd.f32 0.0, %v243
    %v245 = vpop.f32.mrf.mxu0
    %v246 = vpop.f32.mrf.mxu0
    %v247 = vadd.f32 0.0, %v246
    %v248 = vpop.f32.mrf.mxu0
    %249 = vmatprep.mubr.bf16.mxu0 0
    %250 = vmatmul.mubr.bf16.gmra.mxu0 %v201
    %v251 = vpop.f32.mrf.mxu0
    %v252 = vadd.f32 0.0, %v251
    %v253 = vpop.f32.mrf.mxu0
    %v254 = vpop.f32.mrf.mxu0
    %v255 = vadd.f32 0.0, %v254
    %v256 = vpop.f32.mrf.mxu0
    %257 = vmatprep.mubr.bf16.mxu0 0
    %258 = vmatmul.mubr.bf16.gmra.mxu0 %v204
    %v259 = vpop.f32.mrf.mxu0
    %v260 = vadd.f32 0.0, %v259
    %v261 = vpop.f32.mrf.mxu0
    %v262 = vpop.f32.mrf.mxu0
    %v263 = vadd.f32 0.0, %v262
    %v264 = vpop.f32.mrf.mxu0
    %265 = vmatprep.mubr.bf16.mxu0 0
    %266 = vmatmul.mubr.bf16.gmra.mxu0 %v207
    %v267 = vpop.f32.mrf.mxu0
    %v268 = vadd.f32 0.0, %v267
    %v269 = vpop.f32.mrf.mxu0
    %v270 = vpop.f32.mrf.mxu0
    %v271 = vadd.f32 0.0, %v270
    %v272 = vpop.f32.mrf.mxu0
    %273 = vdwg.mxu0
    %v282 = vunpack.c.l.b16 %v32
    %v283 = vunpack.c.l.b16 %v33
    %v284 = vunpack.c.l.b16 %v34
    %v285 = vunpack.c.l.b16 %v35
    %v286 = vunpack.c.l.b16 %v36
    %v287 = vunpack.c.l.b16 %v37
    %v288 = vunpack.c.l.b16 %v38
    %v289 = vunpack.c.l.b16 %v39
    %v290 = vpack.c.b16 %v283, %v282
    %v291 = vpack.c.b16 %v285, %v284
    %v292 = vpack.c.b16 %v287, %v286
    %v293 = vpack.c.b16 %v289, %v288
    %v298 = vunpack.c.l.b16 %v40
    %v299 = vunpack.c.l.b16 %v41
    %v300 = vunpack.c.l.b16 %v42
    %v301 = vunpack.c.l.b16 %v43
    %v302 = vpack.c.b16 %v299, %v298
    %v303 = vpack.c.b16 %v301, %v300
    %v307 = vsel %vm196, %v290, 0
    %v310 = vsel %vm196, %v291, 0
    %v313 = vsel %vm196, %v292, 0
    %v316 = vsel %vm196, %v293, 0
    %318 = vmatprep.subr.bf16.mxu0 0
    %319 = vmatpush1.bf16.msra.mxu0 0
    %320 = vmatprep.subr.bf16.mxu0 0
    %321 = vmatpush1.bf16.msra.mxu0 0
    %322 = vmatprep.subr.bf16.mxu0 0
    %323 = vmatpush1.bf16.msra.mxu0 0
    %324 = vmatprep.subr.bf16.mxu0 0
    %325 = vmatpush1.bf16.msra.mxu0 0
    %326 = vmatprep.subr.bf16.mxu0 0
    %327 = vmatpush1.bf16.msra.mxu0 0
    %328 = vmatprep.subr.bf16.mxu0 0
    %329 = vmatpush1.bf16.msra.mxu0 0
    %330 = vmatprep.subr.bf16.mxu0 0
    %331 = vmatpush1.bf16.msra.mxu0 %v303
    %332 = vmatprep.subr.bf16.mxu0 0
    %333 = vmatpush1.bf16.msra.mxu0 %v302
    %334 = vmatprep.subr.bf16.mxu0 0
    %335 = vmatpush2.bf16.msra.mxu0 0
    %336 = vmatprep.subr.bf16.mxu0 0
    %337 = vmatpush2.bf16.msra.mxu0 0
    %338 = vmatprep.subr.bf16.mxu0 0
    %339 = vmatpush2.bf16.msra.mxu0 0
    %340 = vmatprep.subr.bf16.mxu0 0
    %341 = vmatpush2.bf16.msra.mxu0 0
    %342 = vmatprep.subr.bf16.mxu0 0
    %343 = vmatpush2.bf16.msra.mxu0 0
    %344 = vmatprep.subr.bf16.mxu0 0
    %345 = vmatpush2.bf16.msra.mxu0 0
    %346 = vmatprep.subr.bf16.mxu0 0
    %347 = vmatpush2.bf16.msra.mxu0 0
    %348 = vmatprep.subr.bf16.mxu0 0
    %349 = vmatpush2.bf16.msra.mxu0 0
    %350 = vmatprep.mubr.bf16.mxu0 0
    %351 = vmatmul.mubr.bf16.gmra.mxu0 %v307
    %v352 = vpop.f32.mrf.mxu0
    %v353 = vadd.f32 %v244, %v352
    %v354 = vpop.f32.mrf.mxu0
    %v355 = vpop.f32.mrf.mxu0
    %v356 = vadd.f32 %v247, %v355
    %v357 = vpop.f32.mrf.mxu0
    %358 = vmatprep.mubr.bf16.mxu0 0
    %359 = vmatmul.mubr.bf16.gmra.mxu0 %v310
    %v360 = vpop.f32.mrf.mxu0
    %v361 = vadd.f32 %v252, %v360
    %v362 = vpop.f32.mrf.mxu0
    %v363 = vpop.f32.mrf.mxu0
    %v364 = vadd.f32 %v255, %v363
    %v365 = vpop.f32.mrf.mxu0
    %366 = vmatprep.mubr.bf16.mxu0 0
    %367 = vmatmul.mubr.bf16.gmra.mxu0 %v313
    %v368 = vpop.f32.mrf.mxu0
    %v369 = vadd.f32 %v260, %v368
    %v370 = vpop.f32.mrf.mxu0
    %v371 = vpop.f32.mrf.mxu0
    %v372 = vadd.f32 %v263, %v371
    %v373 = vpop.f32.mrf.mxu0
    %374 = vmatprep.mubr.bf16.mxu0 0
    %375 = vmatmul.mubr.bf16.gmra.mxu0 %v316
    %v376 = vpop.f32.mrf.mxu0
    %v377 = vadd.f32 %v268, %v376
    %v378 = vpop.f32.mrf.mxu0
    %v379 = vpop.f32.mrf.mxu0
    %v380 = vadd.f32 %v271, %v379
    %v381 = vpop.f32.mrf.mxu0
    %382 = vdwg.mxu0
    %v383 = vld [vmem:[%s0] sm:$0xe]
    %v384 = vld [vmem:[%s0 + $0x8] sm:$0xe]
    %v385 = vld [vmem:[%s0 + $0x10] sm:$0xe]
    %v386 = vld [vmem:[%s0 + $0x18] sm:$0xe]
    %v387 = vld [vmem:[%s0 + $0x20] sm:$0xe]
    %v388 = vld [vmem:[%s0 + $0x28] sm:$0xe]
    %v389 = vld [vmem:[%s0 + $0x30] sm:$0xe]
    %v390 = vld [vmem:[%s0 + $0x38] sm:$0xe]
    %vm407 = vcmask 1042432
    %vm408 = vcmask 1046532
    %vm409 = vmor %vm407, %vm408
    %v410 = vrot.slane %v383, 5
    %v411 = vrot.slane %v410, 4
    %v412 = vrot.slane %v44, 5
    %v413 = vsel %vm409, %v411, %v412
    %v414 = vrot.slane %v384, 5
    %v415 = vrot.slane %v414, 4
    %v416 = vrot.slane %v45, 5
    %v417 = vsel %vm409, %v415, %v416
    %v418 = vrot.slane %v385, 5
    %v419 = vrot.slane %v418, 4
    %v420 = vrot.slane %v46, 5
    %v421 = vsel %vm409, %v419, %v420
    %v422 = vrot.slane %v386, 5
    %v423 = vrot.slane %v422, 4
    %v424 = vrot.slane %v47, 5
    %v425 = vsel %vm409, %v423, %v424
    %v426 = vrot.slane %v387, 5
    %v427 = vrot.slane %v426, 4
    %v428 = vrot.slane %v48, 5
    %v429 = vsel %vm409, %v427, %v428
    %v430 = vrot.slane %v388, 5
    %v431 = vrot.slane %v430, 4
    %v432 = vrot.slane %v49, 5
    %v433 = vsel %vm409, %v431, %v432
    %v434 = vrot.slane %v389, 5
    %v435 = vrot.slane %v434, 4
    %v436 = vrot.slane %v50, 5
    %v437 = vsel %vm409, %v435, %v436
    %v438 = vrot.slane %v390, 5
    %v439 = vrot.slane %v438, 4
    %v440 = vrot.slane %v51, 5
    %v441 = vsel %vm409, %v439, %v440
    %s442 = scalar_lea.vmem %s1, 32
    %v443 = vld [vmem:[%s442] sm:$0xf]
    %v444 = vld [vmem:[%s442 + $0x4] sm:$0xf]
    %v445 = vld [vmem:[%s442 + $0x8] sm:$0xf]
    %v446 = vld [vmem:[%s442 + $0xc] sm:$0xf]
    %v447 = vunpack.c.l.b16 %v413
    %v448 = vunpack.c.l.b16 %v417
    %v449 = vunpack.c.l.b16 %v421
    %v450 = vunpack.c.l.b16 %v425
    %v451 = vunpack.c.l.b16 %v429
    %v452 = vunpack.c.l.b16 %v433
    %v453 = vunpack.c.l.b16 %v437
    %v454 = vunpack.c.l.b16 %v441
    %v455 = vpack.c.b16 %v448, %v447
    %v456 = vpack.c.b16 %v450, %v449
    %v457 = vpack.c.b16 %v452, %v451
    %v458 = vpack.c.b16 %v454, %v453
    %v463 = vunpack.c.l.b16 %v443
    %v464 = vunpack.c.l.b16 %v444
    %v465 = vunpack.c.l.b16 %v445
    %v466 = vunpack.c.l.b16 %v446
    %v467 = vpack.c.b16 %v464, %v463
    %v468 = vpack.c.b16 %v466, %v465
    %v472 = vsel %vm196, %v455, 0
    %v475 = vsel %vm196, %v456, 0
    %v478 = vsel %vm196, %v457, 0
    %v481 = vsel %vm196, %v458, 0
    %483 = vmatprep.subr.bf16.mxu0 0
    %484 = vmatpush1.bf16.msra.mxu0 0
    %485 = vmatprep.subr.bf16.mxu0 0
    %486 = vmatpush1.bf16.msra.mxu0 0
    %487 = vmatprep.subr.bf16.mxu0 0
    %488 = vmatpush1.bf16.msra.mxu0 0
    %489 = vmatprep.subr.bf16.mxu0 0
    %490 = vmatpush1.bf16.msra.mxu0 0
    %491 = vmatprep.subr.bf16.mxu0 0
    %492 = vmatpush1.bf16.msra.mxu0 0
    %493 = vmatprep.subr.bf16.mxu0 0
    %494 = vmatpush1.bf16.msra.mxu0 0
    %495 = vmatprep.subr.bf16.mxu0 0
    %496 = vmatpush1.bf16.msra.mxu0 %v468
    %497 = vmatprep.subr.bf16.mxu0 0
    %498 = vmatpush1.bf16.msra.mxu0 %v467
    %499 = vmatprep.subr.bf16.mxu0 0
    %500 = vmatpush2.bf16.msra.mxu0 0
    %501 = vmatprep.subr.bf16.mxu0 0
    %502 = vmatpush2.bf16.msra.mxu0 0
    %503 = vmatprep.subr.bf16.mxu0 0
    %504 = vmatpush2.bf16.msra.mxu0 0
    %505 = vmatprep.subr.bf16.mxu0 0
    %506 = vmatpush2.bf16.msra.mxu0 0
    %507 = vmatprep.subr.bf16.mxu0 0
    %508 = vmatpush2.bf16.msra.mxu0 0
    %509 = vmatprep.subr.bf16.mxu0 0
    %510 = vmatpush2.bf16.msra.mxu0 0
    %511 = vmatprep.subr.bf16.mxu0 0
    %512 = vmatpush2.bf16.msra.mxu0 0
    %513 = vmatprep.subr.bf16.mxu0 0
    %514 = vmatpush2.bf16.msra.mxu0 0
    %515 = vmatprep.mubr.bf16.mxu0 0
    %516 = vmatmul.mubr.bf16.gmra.mxu0 %v472
    %v517 = vpop.f32.mrf.mxu0
    %v518 = vadd.f32 0.0, %v517
    %v519 = vpop.f32.mrf.mxu0
    %v520 = vpop.f32.mrf.mxu0
    %v521 = vadd.f32 0.0, %v520
    %v522 = vpop.f32.mrf.mxu0
    %523 = vmatprep.mubr.bf16.mxu0 0
    %524 = vmatmul.mubr.bf16.gmra.mxu0 %v475
    %v525 = vpop.f32.mrf.mxu0
    %v526 = vadd.f32 0.0, %v525
    %v527 = vpop.f32.mrf.mxu0
    %v528 = vpop.f32.mrf.mxu0
    %v529 = vadd.f32 0.0, %v528
    %v530 = vpop.f32.mrf.mxu0
    %531 = vmatprep.mubr.bf16.mxu0 0
    %532 = vmatmul.mubr.bf16.gmra.mxu0 %v478
    %v533 = vpop.f32.mrf.mxu0
    %v534 = vadd.f32 0.0, %v533
    %v535 = vpop.f32.mrf.mxu0
    %v536 = vpop.f32.mrf.mxu0
    %v537 = vadd.f32 0.0, %v536
    %v538 = vpop.f32.mrf.mxu0
    %539 = vmatprep.mubr.bf16.mxu0 0
    %540 = vmatmul.mubr.bf16.gmra.mxu0 %v481
    %v541 = vpop.f32.mrf.mxu0
    %v542 = vadd.f32 0.0, %v541
    %v543 = vpop.f32.mrf.mxu0
    %v544 = vpop.f32.mrf.mxu0
    %v545 = vadd.f32 0.0, %v544
    %v546 = vpop.f32.mrf.mxu0
    %547 = vdwg.mxu0
    %v548 = vadd.f32 %v353, %v518
    %v549 = vadd.f32 %v356, %v521
    %v550 = vadd.f32 %v361, %v526
    %v551 = vadd.f32 %v364, %v529
    %v552 = vadd.f32 %v369, %v534
    %v553 = vadd.f32 %v372, %v537
    %v554 = vadd.f32 %v377, %v542
    %v555 = vadd.f32 %v380, %v545
    %v556 = vld [vmem:[%s0 + $0x4] sm:$0x3]
    %v557 = vld [vmem:[%s0 + $0xc] sm:$0x3]
    %v558 = vld [vmem:[%s0 + $0x14] sm:$0x3]
    %v559 = vld [vmem:[%s0 + $0x1c] sm:$0x3]
    %v560 = vld [vmem:[%s0 + $0x24] sm:$0x3]
    %v561 = vld [vmem:[%s0 + $0x2c] sm:$0x3]
    %v562 = vld [vmem:[%s0 + $0x34] sm:$0x3]
    %v563 = vld [vmem:[%s0 + $0x3c] sm:$0x3]
    %vm564 = vsmask.f32 2304
    %vm565 = vsmask.f32 6416
    %vm566 = vmor %vm564, %vm565
    %v568 = vshrl.u32 %v383, 16
    %v570 = vrot.slane %v568, 5
    %v571 = vshll.u32 %v383, 16
    %v573 = vrot.slane %v571, 6
    %v574 = vor.u32 %v570, %v573
    %v575 = vrot.slane %v574, 4
    %v577 = vshrl.u32 %v556, 16
    %v579 = vrot.slane %v577, 5
    %v580 = vshll.u32 %v556, 16
    %v582 = vrot.slane %v580, 6
    %v583 = vor.u32 %v579, %v582
    %v584 = vsel %vm566, %v575, %v583
    %v586 = vshrl.u32 %v384, 16
    %v588 = vrot.slane %v586, 5
    %v589 = vshll.u32 %v384, 16
    %v591 = vrot.slane %v589, 6
    %v592 = vor.u32 %v588, %v591
    %v593 = vrot.slane %v592, 4
    %v595 = vshrl.u32 %v557, 16
    %v597 = vrot.slane %v595, 5
    %v598 = vshll.u32 %v557, 16
    %v600 = vrot.slane %v598, 6
    %v601 = vor.u32 %v597, %v600
    %v602 = vsel %vm566, %v593, %v601
    %v604 = vshrl.u32 %v385, 16
    %v606 = vrot.slane %v604, 5
    %v607 = vshll.u32 %v385, 16
    %v609 = vrot.slane %v607, 6
    %v610 = vor.u32 %v606, %v609
    %v611 = vrot.slane %v610, 4
    %v613 = vshrl.u32 %v558, 16
    %v615 = vrot.slane %v613, 5
    %v616 = vshll.u32 %v558, 16
    %v618 = vrot.slane %v616, 6
    %v619 = vor.u32 %v615, %v618
    %v620 = vsel %vm566, %v611, %v619
    %v622 = vshrl.u32 %v386, 16
    %v624 = vrot.slane %v622, 5
    %v625 = vshll.u32 %v386, 16
    %v627 = vrot.slane %v625, 6
    %v628 = vor.u32 %v624, %v627
    %v629 = vrot.slane %v628, 4
    %v631 = vshrl.u32 %v559, 16
    %v633 = vrot.slane %v631, 5
    %v634 = vshll.u32 %v559, 16
    %v636 = vrot.slane %v634, 6
    %v637 = vor.u32 %v633, %v636
    %v638 = vsel %vm566, %v629, %v637
    %v640 = vshrl.u32 %v387, 16
    %v642 = vrot.slane %v640, 5
    %v643 = vshll.u32 %v387, 16
    %v645 = vrot.slane %v643, 6
    %v646 = vor.u32 %v642, %v645
    %v647 = vrot.slane %v646, 4
    %v649 = vshrl.u32 %v560, 16
    %v651 = vrot.slane %v649, 5
    %v652 = vshll.u32 %v560, 16
    %v654 = vrot.slane %v652, 6
    %v655 = vor.u32 %v651, %v654
    %v656 = vsel %vm566, %v647, %v655
    %v658 = vshrl.u32 %v388, 16
    %v660 = vrot.slane %v658, 5
    %v661 = vshll.u32 %v388, 16
    %v663 = vrot.slane %v661, 6
    %v664 = vor.u32 %v660, %v663
    %v665 = vrot.slane %v664, 4
    %v667 = vshrl.u32 %v561, 16
    %v669 = vrot.slane %v667, 5
    %v670 = vshll.u32 %v561, 16
    %v672 = vrot.slane %v670, 6
    %v673 = vor.u32 %v669, %v672
    %v674 = vsel %vm566, %v665, %v673
    %v676 = vshrl.u32 %v389, 16
    %v678 = vrot.slane %v676, 5
    %v679 = vshll.u32 %v389, 16
    %v681 = vrot.slane %v679, 6
    %v682 = vor.u32 %v678, %v681
    %v683 = vrot.slane %v682, 4
    %v685 = vshrl.u32 %v562, 16
    %v687 = vrot.slane %v685, 5
    %v688 = vshll.u32 %v562, 16
    %v690 = vrot.slane %v688, 6
    %v691 = vor.u32 %v687, %v690
    %v692 = vsel %vm566, %v683, %v691
    %v694 = vshrl.u32 %v390, 16
    %v696 = vrot.slane %v694, 5
    %v697 = vshll.u32 %v390, 16
    %v699 = vrot.slane %v697, 6
    %v700 = vor.u32 %v696, %v699
    %v701 = vrot.slane %v700, 4
    %v703 = vshrl.u32 %v563, 16
    %v705 = vrot.slane %v703, 5
    %v706 = vshll.u32 %v563, 16
    %v708 = vrot.slane %v706, 6
    %v709 = vor.u32 %v705, %v708
    %v710 = vsel %vm566, %v701, %v709
    %s711 = scalar_lea.vmem %s1, 48
    %v712 = vld [vmem:[%s711] sm:$0xf]
    %v713 = vld [vmem:[%s711 + $0x4] sm:$0xf]
    %v714 = vld [vmem:[%s711 + $0x8] sm:$0xf]
    %v715 = vld [vmem:[%s711 + $0xc] sm:$0xf]
    %v716 = vunpack.c.l.b16 %v584
    %v717 = vunpack.c.l.b16 %v602
    %v718 = vunpack.c.l.b16 %v620
    %v719 = vunpack.c.l.b16 %v638
    %v720 = vunpack.c.l.b16 %v656
    %v721 = vunpack.c.l.b16 %v674
    %v722 = vunpack.c.l.b16 %v692
    %v723 = vunpack.c.l.b16 %v710
    %v724 = vpack.c.b16 %v717, %v716
    %v725 = vpack.c.b16 %v719, %v718
    %v726 = vpack.c.b16 %v721, %v720
    %v727 = vpack.c.b16 %v723, %v722
    %v732 = vunpack.c.l.b16 %v712
    %v733 = vunpack.c.l.b16 %v713
    %v734 = vunpack.c.l.b16 %v714
    %v735 = vunpack.c.l.b16 %v715
    %v736 = vpack.c.b16 %v733, %v732
    %v737 = vpack.c.b16 %v735, %v734
    %v741 = vsel %vm196, %v724, 0
    %v744 = vsel %vm196, %v725, 0
    %v747 = vsel %vm196, %v726, 0
    %v750 = vsel %vm196, %v727, 0
    %752 = vmatprep.subr.bf16.mxu0 0
    %753 = vmatpush1.bf16.msra.mxu0 0
    %754 = vmatprep.subr.bf16.mxu0 0
    %755 = vmatpush1.bf16.msra.mxu0 0
    %756 = vmatprep.subr.bf16.mxu0 0
    %757 = vmatpush1.bf16.msra.mxu0 0
    %758 = vmatprep.subr.bf16.mxu0 0
    %759 = vmatpush1.bf16.msra.mxu0 0
    %760 = vmatprep.subr.bf16.mxu0 0
    %761 = vmatpush1.bf16.msra.mxu0 0
    %762 = vmatprep.subr.bf16.mxu0 0
    %763 = vmatpush1.bf16.msra.mxu0 0
    %764 = vmatprep.subr.bf16.mxu0 0
    %765 = vmatpush1.bf16.msra.mxu0 %v737
    %766 = vmatprep.subr.bf16.mxu0 0
    %767 = vmatpush1.bf16.msra.mxu0 %v736
    %768 = vmatprep.subr.bf16.mxu0 0
    %769 = vmatpush2.bf16.msra.mxu0 0
    %770 = vmatprep.subr.bf16.mxu0 0
    %771 = vmatpush2.bf16.msra.mxu0 0
    %772 = vmatprep.subr.bf16.mxu0 0
    %773 = vmatpush2.bf16.msra.mxu0 0
    %774 = vmatprep.subr.bf16.mxu0 0
    %775 = vmatpush2.bf16.msra.mxu0 0
    %776 = vmatprep.subr.bf16.mxu0 0
    %777 = vmatpush2.bf16.msra.mxu0 0
    %778 = vmatprep.subr.bf16.mxu0 0
    %779 = vmatpush2.bf16.msra.mxu0 0
    %780 = vmatprep.subr.bf16.mxu0 0
    %781 = vmatpush2.bf16.msra.mxu0 0
    %782 = vmatprep.subr.bf16.mxu0 0
    %783 = vmatpush2.bf16.msra.mxu0 0
    %784 = vmatprep.mubr.bf16.mxu0 0
    %785 = vmatmul.mubr.bf16.gmra.mxu0 %v741
    %v786 = vpop.f32.mrf.mxu0
    %v787 = vadd.f32 0.0, %v786
    %v788 = vpop.f32.mrf.mxu0
    %v789 = vpop.f32.mrf.mxu0
    %v790 = vadd.f32 0.0, %v789
    %v791 = vpop.f32.mrf.mxu0
    %792 = vmatprep.mubr.bf16.mxu0 0
    %793 = vmatmul.mubr.bf16.gmra.mxu0 %v744
    %v794 = vpop.f32.mrf.mxu0
    %v795 = vadd.f32 0.0, %v794
    %v796 = vpop.f32.mrf.mxu0
    %v797 = vpop.f32.mrf.mxu0
    %v798 = vadd.f32 0.0, %v797
    %v799 = vpop.f32.mrf.mxu0
    %800 = vmatprep.mubr.bf16.mxu0 0
    %801 = vmatmul.mubr.bf16.gmra.mxu0 %v747
    %v802 = vpop.f32.mrf.mxu0
    %v803 = vadd.f32 0.0, %v802
    %v804 = vpop.f32.mrf.mxu0
    %v805 = vpop.f32.mrf.mxu0
    %v806 = vadd.f32 0.0, %v805
    %v807 = vpop.f32.mrf.mxu0
    %808 = vmatprep.mubr.bf16.mxu0 0
    %809 = vmatmul.mubr.bf16.gmra.mxu0 %v750
    %v810 = vpop.f32.mrf.mxu0
    %v811 = vadd.f32 0.0, %v810
    %v812 = vpop.f32.mrf.mxu0
    %v813 = vpop.f32.mrf.mxu0
    %v814 = vadd.f32 0.0, %v813
    %v815 = vpop.f32.mrf.mxu0
    %816 = vdwg.mxu0
    %v817 = vadd.f32 %v548, %v787
    %v818 = vadd.f32 %v549, %v790
    %v819 = vadd.f32 %v550, %v795
    %v820 = vadd.f32 %v551, %v798
    %v821 = vadd.f32 %v552, %v803
    %v822 = vadd.f32 %v553, %v806
    %v823 = vadd.f32 %v554, %v811
    %v824 = vadd.f32 %v555, %v814
    %v825 = vld [vmem:[%s0] sm:$0xc]
    %v826 = vld [vmem:[%s0 + $0x8] sm:$0xc]
    %v827 = vld [vmem:[%s0 + $0x10] sm:$0xc]
    %v828 = vld [vmem:[%s0 + $0x18] sm:$0xc]
    %v829 = vld [vmem:[%s0 + $0x20] sm:$0xc]
    %v830 = vld [vmem:[%s0 + $0x28] sm:$0xc]
    %v831 = vld [vmem:[%s0 + $0x30] sm:$0xc]
    %v832 = vld [vmem:[%s0 + $0x38] sm:$0xc]
    %vm849 = vcmask 1041408
    %vm850 = vcmask 1045508
    %vm851 = vmor %vm849, %vm850
    %v852 = vrot.slane %v825, 6
    %v853 = vrot.slane %v852, 4
    %v854 = vrot.slane %v556, 6
    %v855 = vsel %vm851, %v853, %v854
    %v856 = vrot.slane %v826, 6
    %v857 = vrot.slane %v856, 4
    %v858 = vrot.slane %v557, 6
    %v859 = vsel %vm851, %v857, %v858
    %v860 = vrot.slane %v827, 6
    %v861 = vrot.slane %v860, 4
    %v862 = vrot.slane %v558, 6
    %v863 = vsel %vm851, %v861, %v862
    %v864 = vrot.slane %v828, 6
    %v865 = vrot.slane %v864, 4
    %v866 = vrot.slane %v559, 6
    %v867 = vsel %vm851, %v865, %v866
    %v868 = vrot.slane %v829, 6
    %v869 = vrot.slane %v868, 4
    %v870 = vrot.slane %v560, 6
    %v871 = vsel %vm851, %v869, %v870
    %v872 = vrot.slane %v830, 6
    %v873 = vrot.slane %v872, 4
    %v874 = vrot.slane %v561, 6
    %v875 = vsel %vm851, %v873, %v874
    %v876 = vrot.slane %v831, 6
    %v877 = vrot.slane %v876, 4
    %v878 = vrot.slane %v562, 6
    %v879 = vsel %vm851, %v877, %v878
    %v880 = vrot.slane %v832, 6
    %v881 = vrot.slane %v880, 4
    %v882 = vrot.slane %v563, 6
    %v883 = vsel %vm851, %v881, %v882
    %s884 = scalar_lea.vmem %s1, 64
    %v885 = vld [vmem:[%s884] sm:$0xf]
    %v886 = vld [vmem:[%s884 + $0x4] sm:$0xf]
    %v887 = vld [vmem:[%s884 + $0x8] sm:$0xf]
    %v888 = vld [vmem:[%s884 + $0xc] sm:$0xf]
    %v889 = vunpack.c.l.b16 %v855
    %v890 = vunpack.c.l.b16 %v859
    %v891 = vunpack.c.l.b16 %v863
    %v892 = vunpack.c.l.b16 %v867
    %v893 = vunpack.c.l.b16 %v871
    %v894 = vunpack.c.l.b16 %v875
    %v895 = vunpack.c.l.b16 %v879
    %v896 = vunpack.c.l.b16 %v883
    %v897 = vpack.c.b16 %v890, %v889
    %v898 = vpack.c.b16 %v892, %v891
    %v899 = vpack.c.b16 %v894, %v893
    %v900 = vpack.c.b16 %v896, %v895
    %v905 = vunpack.c.l.b16 %v885
    %v906 = vunpack.c.l.b16 %v886
    %v907 = vunpack.c.l.b16 %v887
    %v908 = vunpack.c.l.b16 %v888
    %v909 = vpack.c.b16 %v906, %v905
    %v910 = vpack.c.b16 %v908, %v907
    %v914 = vsel %vm196, %v897, 0
    %v917 = vsel %vm196, %v898, 0
    %v920 = vsel %vm196, %v899, 0
    %v923 = vsel %vm196, %v900, 0
    %925 = vmatprep.subr.bf16.mxu0 0
    %926 = vmatpush1.bf16.msra.mxu0 0
    %927 = vmatprep.subr.bf16.mxu0 0
    %928 = vmatpush1.bf16.msra.mxu0 0
    %929 = vmatprep.subr.bf16.mxu0 0
    %930 = vmatpush1.bf16.msra.mxu0 0
    %931 = vmatprep.subr.bf16.mxu0 0
    %932 = vmatpush1.bf16.msra.mxu0 0
    %933 = vmatprep.subr.bf16.mxu0 0
    %934 = vmatpush1.bf16.msra.mxu0 0
    %935 = vmatprep.subr.bf16.mxu0 0
    %936 = vmatpush1.bf16.msra.mxu0 0
    %937 = vmatprep.subr.bf16.mxu0 0
    %938 = vmatpush1.bf16.msra.mxu0 %v910
    %939 = vmatprep.subr.bf16.mxu0 0
    %940 = vmatpush1.bf16.msra.mxu0 %v909
    %941 = vmatprep.subr.bf16.mxu0 0
    %942 = vmatpush2.bf16.msra.mxu0 0
    %943 = vmatprep.subr.bf16.mxu0 0
    %944 = vmatpush2.bf16.msra.mxu0 0
    %945 = vmatprep.subr.bf16.mxu0 0
    %946 = vmatpush2.bf16.msra.mxu0 0
    %947 = vmatprep.subr.bf16.mxu0 0
    %948 = vmatpush2.bf16.msra.mxu0 0
    %949 = vmatprep.subr.bf16.mxu0 0
    %950 = vmatpush2.bf16.msra.mxu0 0
    %951 = vmatprep.subr.bf16.mxu0 0
    %952 = vmatpush2.bf16.msra.mxu0 0
    %953 = vmatprep.subr.bf16.mxu0 0
    %954 = vmatpush2.bf16.msra.mxu0 0
    %955 = vmatprep.subr.bf16.mxu0 0
    %956 = vmatpush2.bf16.msra.mxu0 0
    %957 = vmatprep.mubr.bf16.mxu0 0
    %958 = vmatmul.mubr.bf16.gmra.mxu0 %v914
    %v959 = vpop.f32.mrf.mxu0
    %v960 = vadd.f32 0.0, %v959
    %v961 = vpop.f32.mrf.mxu0
    %v962 = vpop.f32.mrf.mxu0
    %v963 = vadd.f32 0.0, %v962
    %v964 = vpop.f32.mrf.mxu0
    %965 = vmatprep.mubr.bf16.mxu0 0
    %966 = vmatmul.mubr.bf16.gmra.mxu0 %v917
    %v967 = vpop.f32.mrf.mxu0
    %v968 = vadd.f32 0.0, %v967
    %v969 = vpop.f32.mrf.mxu0
    %v970 = vpop.f32.mrf.mxu0
    %v971 = vadd.f32 0.0, %v970
    %v972 = vpop.f32.mrf.mxu0
    %973 = vmatprep.mubr.bf16.mxu0 0
    %974 = vmatmul.mubr.bf16.gmra.mxu0 %v920
    %v975 = vpop.f32.mrf.mxu0
    %v976 = vadd.f32 0.0, %v975
    %v977 = vpop.f32.mrf.mxu0
    %v978 = vpop.f32.mrf.mxu0
    %v979 = vadd.f32 0.0, %v978
    %v980 = vpop.f32.mrf.mxu0
    %981 = vmatprep.mubr.bf16.mxu0 0
    %982 = vmatmul.mubr.bf16.gmra.mxu0 %v923
    %v983 = vpop.f32.mrf.mxu0
    %v984 = vadd.f32 0.0, %v983
    %v985 = vpop.f32.mrf.mxu0
    %v986 = vpop.f32.mrf.mxu0
    %v987 = vadd.f32 0.0, %v986
    %v988 = vpop.f32.mrf.mxu0
    %989 = vdwg.mxu0
    %v990 = vadd.f32 %v817, %v960
    %v991 = vadd.f32 %v818, %v963
    %v992 = vadd.f32 %v819, %v968
    %v993 = vadd.f32 %v820, %v971
    %v994 = vadd.f32 %v821, %v976
    %v995 = vadd.f32 %v822, %v979
    %v996 = vadd.f32 %v823, %v984
    %v997 = vadd.f32 %v824, %v987
    %v998 = vlaneseq
    %v999 = vshrl.u32 %v998, 7
    %v1000 = vsub.s32 0, %v999
    %v1001 = vrot.slane %v31, %v1000
    %v1002 = vadd.f32 %v990, %v1001
    %v1003 = vadd.f32 %v991, %v1001
    %v1004 = vadd.f32 %v992, %v1001
    %v1005 = vadd.f32 %v993, %v1001
    %v1006 = vadd.f32 %v994, %v1001
    %v1007 = vadd.f32 %v995, %v1001
    %v1008 = vadd.f32 %v996, %v1001
    %v1009 = vadd.f32 %v997, %v1001
    %v1010 = vmax.f32 %v1002, 0.0
    %v1011 = vmax.f32 %v1003, 0.0
    %v1012 = vmax.f32 %v1004, 0.0
    %v1013 = vmax.f32 %v1005, 0.0
    %v1014 = vmax.f32 %v1006, 0.0
    %v1015 = vmax.f32 %v1007, 0.0
    %v1016 = vmax.f32 %v1008, 0.0
    %v1017 = vmax.f32 %v1009, 0.0
    %v1018 = vrot.slane %v1010, 4
    %v1019 = vmax.f32 %v1010, %v1018
    %v1020 = vrot.slane %v1019, 2
    %v1021 = vmax.f32 %v1019, %v1020
    %v1022 = vrot.slane %v1021, 1
    %v1023 = vmax.f32 %v1021, %v1022
    %v1024 = vrot.slane %v1011, 4
    %v1025 = vmax.f32 %v1011, %v1024
    %v1026 = vrot.slane %v1025, 2
    %v1027 = vmax.f32 %v1025, %v1026
    %v1028 = vrot.slane %v1027, 1
    %v1029 = vmax.f32 %v1027, %v1028
    %v1030 = vrot.slane %v1012, 4
    %v1031 = vmax.f32 %v1012, %v1030
    %v1032 = vrot.slane %v1031, 2
    %v1033 = vmax.f32 %v1031, %v1032
    %v1034 = vrot.slane %v1033, 1
    %v1035 = vmax.f32 %v1033, %v1034
    %v1036 = vrot.slane %v1013, 4
    %v1037 = vmax.f32 %v1013, %v1036
    %v1038 = vrot.slane %v1037, 2
    %v1039 = vmax.f32 %v1037, %v1038
    %v1040 = vrot.slane %v1039, 1
    %v1041 = vmax.f32 %v1039, %v1040
    %v1042 = vrot.slane %v1014, 4
    %v1043 = vmax.f32 %v1014, %v1042
    %v1044 = vrot.slane %v1043, 2
    %v1045 = vmax.f32 %v1043, %v1044
    %v1046 = vrot.slane %v1045, 1
    %v1047 = vmax.f32 %v1045, %v1046
    %v1048 = vrot.slane %v1015, 4
    %v1049 = vmax.f32 %v1015, %v1048
    %v1050 = vrot.slane %v1049, 2
    %v1051 = vmax.f32 %v1049, %v1050
    %v1052 = vrot.slane %v1051, 1
    %v1053 = vmax.f32 %v1051, %v1052
    %v1054 = vrot.slane %v1016, 4
    %v1055 = vmax.f32 %v1016, %v1054
    %v1056 = vrot.slane %v1055, 2
    %v1057 = vmax.f32 %v1055, %v1056
    %v1058 = vrot.slane %v1057, 1
    %v1059 = vmax.f32 %v1057, %v1058
    %v1060 = vrot.slane %v1017, 4
    %v1061 = vmax.f32 %v1017, %v1060
    %v1062 = vrot.slane %v1061, 2
    %v1063 = vmax.f32 %v1061, %v1062
    %v1064 = vrot.slane %v1063, 1
    %v1065 = vmax.f32 %v1063, %v1064
    %v1066 = vpack.c.bf16 %v1023, %v1023
    %v1067 = vpack.c.bf16 %v1029, %v1029
    %v1068 = vpack.c.bf16 %v1035, %v1035
    %v1069 = vpack.c.bf16 %v1041, %v1041
    %v1070 = vpack.c.bf16 %v1047, %v1047
    %v1071 = vpack.c.bf16 %v1053, %v1053
    %v1072 = vpack.c.bf16 %v1059, %v1059
    %v1073 = vpack.c.bf16 %v1065, %v1065
    %v1074 = vld [vmem:[#allocation2] sm:$0xf]
    %v1075 = vld [vmem:[#allocation2 + $0x4] sm:$0xf]
    %v1076 = vld [vmem:[#allocation2 + $0x8] sm:$0xf]
    %v1077 = vld [vmem:[#allocation2 + $0xc] sm:$0xf]
    %v1078 = vld [vmem:[#allocation2 + $0x10] sm:$0xf]
    %v1079 = vld [vmem:[#allocation2 + $0x14] sm:$0xf]
    %v1080 = vld [vmem:[#allocation2 + $0x18] sm:$0xf]
    %v1081 = vld [vmem:[#allocation2 + $0x1c] sm:$0xf]
    %v1082 = vld [vmem:[#allocation2 + $0x20] sm:$0xf]
    %v1083 = vld [vmem:[#allocation2 + $0x24] sm:$0xf]
    %v1084 = vld [vmem:[#allocation2 + $0x28] sm:$0xf]
    %v1085 = vld [vmem:[#allocation2 + $0x2c] sm:$0xf]
    %v1086 = vld [vmem:[#allocation2 + $0x30] sm:$0xf]
    %v1087 = vld [vmem:[#allocation2 + $0x34] sm:$0xf]
    %v1088 = vld [vmem:[#allocation2 + $0x38] sm:$0xf]
    %v1089 = vld [vmem:[#allocation2 + $0x3c] sm:$0xf]
    %v1090 = vlaneseq
    %v1091 = vshrl.u32 %v1090, 7
    %v1092 = vsub.s32 1, %v1091
    %v1093 = vrot.slane %v31, %v1092
    %v1102 = vunpack.c.l.b16 %v1066
    %v1103 = vunpack.c.l.b16 %v1067
    %v1104 = vunpack.c.l.b16 %v1068
    %v1105 = vunpack.c.l.b16 %v1069
    %v1106 = vunpack.c.l.b16 %v1070
    %v1107 = vunpack.c.l.b16 %v1071
    %v1108 = vunpack.c.l.b16 %v1072
    %v1109 = vunpack.c.l.b16 %v1073
    %vm1110 = vcmask 1041409
    %v1111 = vsel %vm1110, %v1103, %v1102
    %vm1112 = vcmask 1042434
    %v1113 = vsel %vm1112, %v1104, %v1111
    %vm1114 = vcmask 1043459
    %v1115 = vsel %vm1114, %v1105, %v1113
    %vm1116 = vcmask 1044484
    %v1117 = vsel %vm1116, %v1106, %v1115
    %vm1118 = vcmask 1045509
    %v1119 = vsel %vm1118, %v1107, %v1117
    %vm1120 = vcmask 1046534
    %v1121 = vsel %vm1120, %v1108, %v1119
    %vm1122 = vcmask 1047559
    %v1123 = vsel %vm1122, %v1109, %v1121
    %v1124 = vpack.c.b16 %v1123, %v1123
    %v1142 = vunpack.c.l.b16 %v1074
    %v1143 = vunpack.c.l.b16 %v1075
    %v1144 = vunpack.c.l.b16 %v1076
    %v1145 = vunpack.c.l.b16 %v1077
    %v1146 = vunpack.c.l.b16 %v1078
    %v1147 = vunpack.c.l.b16 %v1079
    %v1148 = vunpack.c.l.b16 %v1080
    %v1149 = vunpack.c.l.b16 %v1081
    %v1150 = vunpack.c.l.b16 %v1082
    %v1151 = vunpack.c.l.b16 %v1083
    %v1152 = vunpack.c.l.b16 %v1084
    %v1153 = vunpack.c.l.b16 %v1085
    %v1154 = vunpack.c.l.b16 %v1086
    %v1155 = vunpack.c.l.b16 %v1087
    %v1156 = vunpack.c.l.b16 %v1088
    %v1157 = vunpack.c.l.b16 %v1089
    %v1158 = vpack.c.b16 %v1143, %v1142
    %v1159 = vpack.c.b16 %v1145, %v1144
    %v1160 = vpack.c.b16 %v1147, %v1146
    %v1161 = vpack.c.b16 %v1149, %v1148
    %v1162 = vpack.c.b16 %v1151, %v1150
    %v1163 = vpack.c.b16 %v1153, %v1152
    %v1164 = vpack.c.b16 %v1155, %v1154
    %v1165 = vpack.c.b16 %v1157, %v1156
    %1174 = vmatprep.subr.bf16.mxu0 0
    %1175 = vmatpush1.bf16.msra.mxu0 %v1165
    %1176 = vmatprep.subr.bf16.mxu0 0
    %1177 = vmatpush1.bf16.msra.mxu0 %v1164
    %1178 = vmatprep.subr.bf16.mxu0 0
    %1179 = vmatpush1.bf16.msra.mxu0 %v1163
    %1180 = vmatprep.subr.bf16.mxu0 0
    %1181 = vmatpush1.bf16.msra.mxu0 %v1162
    %1182 = vmatprep.subr.bf16.mxu0 0
    %1183 = vmatpush1.bf16.msra.mxu0 %v1161
    %1184 = vmatprep.subr.bf16.mxu0 0
    %1185 = vmatpush1.bf16.msra.mxu0 %v1160
    %1186 = vmatprep.subr.bf16.mxu0 0
    %1187 = vmatpush1.bf16.msra.mxu0 %v1159
    %1188 = vmatprep.subr.bf16.mxu0 0
    %1189 = vmatpush1.bf16.msra.mxu0 %v1158
    %1190 = vmatprep.subr.bf16.mxu0 0
    %1191 = vmatpush2.bf16.msra.mxu0 0
    %1192 = vmatprep.subr.bf16.mxu0 0
    %1193 = vmatpush2.bf16.msra.mxu0 0
    %1194 = vmatprep.subr.bf16.mxu0 0
    %1195 = vmatpush2.bf16.msra.mxu0 0
    %1196 = vmatprep.subr.bf16.mxu0 0
    %1197 = vmatpush2.bf16.msra.mxu0 0
    %1198 = vmatprep.subr.bf16.mxu0 0
    %1199 = vmatpush2.bf16.msra.mxu0 0
    %1200 = vmatprep.subr.bf16.mxu0 0
    %1201 = vmatpush2.bf16.msra.mxu0 0
    %1202 = vmatprep.subr.bf16.mxu0 0
    %1203 = vmatpush2.bf16.msra.mxu0 0
    %1204 = vmatprep.subr.bf16.mxu0 0
    %1205 = vmatpush2.bf16.msra.mxu0 0
    %1206 = vmatprep.mubr.bf16.mxu0 0
    %1207 = vmatmul.mubr.bf16.gmra.mxu0 %v1124
    %v1208 = vpop.f32.mrf.mxu0
    %v1209 = vadd.f32 %v1093, %v1208
    %v1210 = vpop.f32.mrf.mxu0
    %v1211 = vpop.f32.mrf.mxu0
    %v1212 = vpop.f32.mrf.mxu0
    %1213 = vdwg.mxu0
    %1214 = vst [vmem:[%s3] sm:$0xff] %v1209
    // Predicated region
    $region18: #{cnn_forward.1} parent=1 // pred_check
      _
    $region19: #{cnn_forward.1} parent=1 // pred_check_branch
      %1216 = sbr.rel (0) target = $region21
    $region20: #{cnn_forward.1} parent=1 // pred_region
      _
    $region21: #{cnn_forward.1} parent=1 // pred_fallthru
      _
    // Predicated region
    $region22: #{cnn_forward.1} parent=1 // pred_check
      _
    $region23: #{cnn_forward.1} parent=1 // pred_check_branch
      %1218 = sbr.rel (0) target = $region25
    $region24: #{cnn_forward.1} parent=1 // pred_region
      _
    $region25: #{cnn_forward.1} parent=1 // pred_fallthru
      _
    %1219 = vsyncpa [#allocation3], 1

</llo_original>
